<compile_context>
chip_gen: v7x
topology: tpu7x:2x2x1
jax: 0.10.0
libtpu: 0.0.40
codegen_flags: <defaults>
</compile_context>

<pallas_src>
import functools

import jax
import jax.numpy as jnp
from jax.experimental import pallas as pl
from jax.experimental.pallas import tpu as pltpu


def _round_up(a, b):
    return ((a + b - 1) // b) * b


def _sublane_multiple(dtype):
    # f32 -> 8, bf16 -> 16, int8/fp8 -> 32 (sub-32-bit dtypes pack along sublanes).
    return max(8, 32 // jnp.dtype(dtype).itemsize)


def _lora_svd_linear_kernel(x_ref, w_in_ref, w_out_ref, o_ref, *, compute_dtype):
    x = x_ref[...]
    if compute_dtype is not None:
        x = x.astype(compute_dtype)          # VPU cast, hidden under the MXU
    # Fused stem + LoRA:  (x @ [L1|la]) @ [[L2],[lb]]  ==  x@L1@L2 + x@la@lb
    h = jnp.dot(x, w_in_ref[...], preferred_element_type=jnp.float32)
    acc = jnp.dot(h.astype(w_out_ref.dtype), w_out_ref[...],
                  preferred_element_type=jnp.float32)
    o_ref[...] = acc.astype(o_ref.dtype)


def lora_svd_linear(x, L1, L2, la, lb, *, tm=512, tn=1024,
                    compute_dtype=None, out_dtype=None):
    """Fused LoRASVDLinear forward.

    x: (..., in_f); L1: (in_f, r_svd); L2: (r_svd, out_f);
    la: (in_f, r_lora); lb: (r_lora, out_f).

    tm / tn are the row / out-feature tile sizes (upper bounds; the tile plan is
    shrunk automatically to fit the chip's VMEM).  On v5e / v6e / v7x pass
    compute_dtype=jnp.bfloat16 to halve weight HBM traffic and use the MXU's
    native bf16 path (x is cast in-kernel, so its HBM stream stays single-read);
    pass out_dtype=jnp.bfloat16 as well if the consumer accepts it.
    Note: for tiny problems (a few KB total) plain XLA `x@L1@L2 + x@la@lb` has
    lower fixed overhead than any pallas_call.
    """
    in_f, svd_rank = L1.shape
    svd_rank2, out_f = L2.shape
    in_f2, lora_rank = la.shape
    lora_rank2, out_f2 = lb.shape
    assert svd_rank == svd_rank2 and lora_rank == lora_rank2
    assert in_f == in_f2 and out_f == out_f2 and x.shape[-1] == in_f

    lead_shape = x.shape[:-1]
    out_dtype = out_dtype or x.dtype
    x2d = x.reshape(-1, in_f)
    M = x2d.shape[0]
    r = svd_rank + lora_rank

    # Small weight prep (cheap, done once): merge the two branches.
    if compute_dtype is not None:
        L1 = L1.astype(compute_dtype)
        L2 = L2.astype(compute_dtype)
        la = la.astype(compute_dtype)
        lb = lb.astype(compute_dtype)
    w_in = jnp.concatenate([L1, la], axis=1)    # (in_f, r)
    w_out = jnp.concatenate([L2, lb], axis=0)   # (r, out_f)

    x_item = jnp.dtype(x2d.dtype).itemsize
    w_item = jnp.dtype(w_in.dtype).itemsize
    o_item = jnp.dtype(out_dtype).itemsize

    # --- tile plan -----------------------------------------------------------
    sub = max(_sublane_multiple(x2d.dtype), _sublane_multiple(out_dtype))
    tm_eff = max(sub, min(_round_up(tm, sub), _round_up(M, sub)))
    if out_f <= 128:
        tn_eff = out_f                                   # full dim (always legal)
    else:
        tn_eff = min(_round_up(tn, 128), _round_up(out_f, 128))

    def plan_bytes(tm_e, tn_e):
        # auto-pipeline: x / w_out / out double-buffered, w_in single-buffered.
        return (2 * tm_e * in_f * x_item
                + 1 * in_f * r * w_item
                + 2 * r * tn_e * w_item
                + 2 * tm_e * tn_e * o_item)

    try:
        vmem_cap = int(pltpu.get_tpu_info().vmem_capacity_bytes)
    except Exception:
        vmem_cap = 64 << 20        # conservative (v7x per-TC) fallback
    budget = int(vmem_cap * 0.6)   # headroom for compiler scratch / vregs

    while plan_bytes(tm_eff, tn_eff) > budget and tm_eff > sub:
        tm_eff = max(sub, _round_up(tm_eff // 2, sub))
    while plan_bytes(tm_eff, tn_eff) > budget and out_f > 128 and tn_eff > 128:
        tn_eff = max(128, _round_up(tn_eff // 2, 128))

    grid_m, grid_n = pl.cdiv(M, tm_eff), pl.cdiv(out_f, tn_eff)
    # Megacore: make sure a (1,1) grid gets split so both TCs (v7x) have work.
    if grid_m * grid_n == 1:
        if M >= 2 * sub:
            tm_eff = max(sub, _round_up(tm_eff // 2, sub))
        elif out_f > 128:
            tn_eff = max(128, _round_up(tn_eff // 2, 128))
        grid_m, grid_n = pl.cdiv(M, tm_eff), pl.cdiv(out_f, tn_eff)
    grid = (grid_m, grid_n)

    needed = plan_bytes(tm_eff, tn_eff)
    vmem_limit = int(min(max(needed * 3 // 2 + (4 << 20), 16 << 20),
                         vmem_cap - (8 << 20)))

    flops = 2 * M * (in_f * r + r * out_f)
    bytes_accessed = (M * in_f * x_item + M * out_f * o_item
                      + in_f * r * w_item + r * out_f * w_item)
    cost = pl.CostEstimate(flops=int(flops), transcendentals=0,
                           bytes_accessed=int(bytes_accessed))

    kernel_fn = functools.partial(_lora_svd_linear_kernel,
                                  compute_dtype=compute_dtype)

    def _run(single_buffer_weights):
        if single_buffer_weights:
            w_in_spec = pl.BlockSpec((in_f, r), lambda i, j: (0, 0),
                                     pipeline_mode=pl.Buffered(1))
        else:
            w_in_spec = pl.BlockSpec((in_f, r), lambda i, j: (0, 0))
        return pl.pallas_call(
            kernel_fn,
            out_shape=jax.ShapeDtypeStruct((M, out_f), out_dtype),
            grid_spec=pltpu.PrefetchScalarGridSpec(
                num_scalar_prefetch=0,
                grid=grid,
                in_specs=[
                    pl.BlockSpec((tm_eff, in_f), lambda i, j: (i, 0)),   # x row tile
                    w_in_spec,                                           # W_in (whole, 1-buf)
                    pl.BlockSpec((r, tn_eff), lambda i, j: (0, j)),      # W_out col tile
                ],
                out_specs=pl.BlockSpec((tm_eff, tn_eff), lambda i, j: (i, j)),
            ),
            compiler_params=pltpu.CompilerParams(
                dimension_semantics=("parallel", "parallel"),
                vmem_limit_bytes=vmem_limit),
            cost_estimate=cost,
        )(x2d, w_in, w_out)

    try:
        out2d = _run(True)
    except Exception:
        # pipeline_mode=pl.Buffered(1) not supported on this jax version/backend;
        # fall back to default double-buffering (correctness identical).
        out2d = _run(False)

    return out2d.reshape(*lead_shape, out_f)


if __name__ == "__main__":
    # Small, module-consistent shapes: batch=2, seq=8, in_f=32, svd_rank=8,
    # lora_rank=4, out_f=32.
    batch, seq, in_f, svd_rank, lora_rank, out_f = 2, 8, 32, 8, 4, 32

    key = jax.random.PRNGKey(0)
    kx, k1, k2, ka, kb = jax.random.split(key, 5)
    x = jax.random.normal(kx, (batch, seq, in_f), dtype=jnp.float32)
    L1 = jax.random.normal(k1, (in_f, svd_rank), dtype=jnp.float32) * 0.1
    L2 = jax.random.normal(k2, (svd_rank, out_f), dtype=jnp.float32) * 0.1
    la = jax.random.normal(ka, (in_f, lora_rank), dtype=jnp.float32) * 0.1
    lb = jax.random.normal(kb, (lora_rank, out_f), dtype=jnp.float32) * 0.1

    out = lora_svd_linear(x, L1, L2, la, lb)
    out = jax.block_until_ready(out)

    # Reference: same math as LoRASVDLinear.forward (stem + LoRA).
    x2d = x.reshape(-1, in_f)
    ref = (x2d @ L1 @ L2 + x2d @ la @ lb).reshape(batch, seq, out_f)
    assert out.shape == (batch, seq, out_f)
    assert jnp.allclose(out, ref, atol=1e-4, rtol=1e-4), float(
        jnp.max(jnp.abs(out - ref)))

    print("KERNEL_OK")
</pallas_src>

<mosaic_0001>
module attributes {stable_mosaic.version = 11 : i64} {
  func.func @_lora_svd_linear_kernel(%arg0: i32, %arg1: i32, %arg2: memref<8x32xf32, #tpu.memory_space<vmem>>, %arg3: memref<32x12xf32, #tpu.memory_space<vmem>>, %arg4: memref<12x32xf32, #tpu.memory_space<vmem>>, %arg5: memref<8x32xf32, #tpu.memory_space<vmem>>) attributes {dimension_semantics = [#tpu.dimension_semantics<parallel>, #tpu.dimension_semantics<parallel>], iteration_bounds = array<i64: 2, 1>, scalar_prefetch = 0 : i64, scratch_operands = 0 : i64, tpu.core_type = #tpu.core_type<tc>, window_params = [{transform_indices = @transform_0, window_bounds = array<i64: 8, 32>}, {pipeline_mode = #tpu.pipeline_mode<synchronous>, transform_indices = @transform_1, window_bounds = array<i64: 32, 12>}, {transform_indices = @transform_2, window_bounds = array<i64: 12, 32>}, {transform_indices = @transform_3, window_bounds = array<i64: 8, 32>}]} {
    %c0 = arith.constant 0 : index
    %c0_0 = arith.constant 0 : index
    %0 = vector.load %arg2[%c0, %c0_0] : memref<8x32xf32, #tpu.memory_space<vmem>>, vector<8x32xf32>
    %c0_1 = arith.constant 0 : index
    %c0_2 = arith.constant 0 : index
    %1 = vector.load %arg3[%c0_1, %c0_2] : memref<32x12xf32, #tpu.memory_space<vmem>>, vector<32x12xf32>
    %cst = arith.constant dense<0.000000e+00> : vector<8x12xf32>
    %2 = tpu.matmul %0, %1, %cst {dimension_numbers = #tpu.dot_dimension_numbers<[1], [0], [0], [1], [0, 0, 1, 1], [], []>} : vector<8x32xf32>, vector<32x12xf32>, vector<8x12xf32> -> vector<8x12xf32>
    %c0_3 = arith.constant 0 : index
    %c0_4 = arith.constant 0 : index
    %3 = vector.load %arg4[%c0_3, %c0_4] : memref<12x32xf32, #tpu.memory_space<vmem>>, vector<12x32xf32>
    %cst_5 = arith.constant dense<0.000000e+00> : vector<8x32xf32>
    %4 = tpu.matmul %2, %3, %cst_5 {dimension_numbers = #tpu.dot_dimension_numbers<[1], [0], [0], [1], [0, 0, 1, 1], [], []>} : vector<8x12xf32>, vector<12x32xf32>, vector<8x32xf32> -> vector<8x32xf32>
    %c0_6 = arith.constant 0 : index
    %c0_7 = arith.constant 0 : index
    %5 = vector.load %arg5[%c0_6, %c0_7] : memref<8x32xf32, #tpu.memory_space<vmem>>, vector<8x32xf32>
    tpu.vector_store %arg5[%c0_6, %c0_7], %4 {strides = array<i32>} : memref<8x32xf32, #tpu.memory_space<vmem>>, vector<8x32xf32>,
    return
  }
  func.func @transform_0(%arg0: i32, %arg1: i32) -> (i32, i32) {
    %c0_i32 = arith.constant 0 : i32
    %c0_i32_0 = arith.constant 0 : i32
    return %arg0, %c0_i32 : i32, i32
  }
  func.func @transform_1(%arg0: i32, %arg1: i32) -> (i32, i32) {
    %c0_i32 = arith.constant 0 : i32
    %c0_i32_0 = arith.constant 0 : i32
    %c0_i32_1 = arith.constant 0 : i32
    return %c0_i32, %c0_i32_0 : i32, i32
  }
  func.func @transform_2(%arg0: i32, %arg1: i32) -> (i32, i32) {
    %c0_i32 = arith.constant 0 : i32
    %c0_i32_0 = arith.constant 0 : i32
    return %c0_i32, %arg1 : i32, i32
  }
  func.func @transform_3(%arg0: i32, %arg1: i32) -> (i32, i32) {
    %c0_i32 = arith.constant 0 : i32
    return %arg0, %arg1 : i32, i32
  }
}

module attributes {stable_mosaic.version = 11 : i64} {
  func.func @_lora_svd_linear_kernel(%arg0: i32, %arg1: i32, %arg2: memref<8x32xf32, #tpu.memory_space<vmem>>, %arg3: memref<32x12xf32, #tpu.memory_space<vmem>>, %arg4: memref<12x32xf32, #tpu.memory_space<vmem>>, %arg5: memref<8x32xf32, #tpu.memory_space<vmem>>) attributes {dimension_semantics = [#tpu.dimension_semantics<parallel>, #tpu.dimension_semantics<parallel>], iteration_bounds = array<i64: 2, 1>, scalar_prefetch = 0 : i64, scratch_operands = 0 : i64, tpu.core_type = #tpu.core_type<tc>, window_params = [{transform_indices = @transform_0, window_bounds = array<i64: 8, 32>}, {pipeline_mode = #tpu.pipeline_mode<synchronous>, transform_indices = @transform_1, window_bounds = array<i64: 32, 12>}, {transform_indices = @transform_2, window_bounds = array<i64: 12, 32>}, {transform_indices = @transform_3, window_bounds = array<i64: 8, 32>}]} {
    %c0 = arith.constant 0 : index
    %c0_0 = arith.constant 0 : index
    %0 = vector.load %arg2[%c0, %c0_0] : memref<8x32xf32, #tpu.memory_space<vmem>>, vector<8x32xf32>
    %c0_1 = arith.constant 0 : index
    %c0_2 = arith.constant 0 : index
    %1 = vector.load %arg3[%c0_1, %c0_2] : memref<32x12xf32, #tpu.memory_space<vmem>>, vector<32x12xf32>
    %cst = arith.constant dense<0.000000e+00> : vector<8x12xf32>
    %2 = tpu.matmul %0, %1, %cst {dimension_numbers = #tpu.dot_dimension_numbers<[1], [0], [0], [1], [0, 0, 1, 1], [], []>} : vector<8x32xf32>, vector<32x12xf32>, vector<8x12xf32> -> vector<8x12xf32>
    %c0_3 = arith.constant 0 : index
    %c0_4 = arith.constant 0 : index
    %3 = vector.load %arg4[%c0_3, %c0_4] : memref<12x32xf32, #tpu.memory_space<vmem>>, vector<12x32xf32>
    %cst_5 = arith.constant dense<0.000000e+00> : vector<8x32xf32>
    %4 = tpu.matmul %2, %3, %cst_5 {dimension_numbers = #tpu.dot_dimension_numbers<[1], [0], [0], [1], [0, 0, 1, 1], [], []>} : vector<8x12xf32>, vector<12x32xf32>, vector<8x32xf32> -> vector<8x32xf32>
    %c0_6 = arith.constant 0 : index
    %c0_7 = arith.constant 0 : index
    %5 = vector.load %arg5[%c0_6, %c0_7] : memref<8x32xf32, #tpu.memory_space<vmem>>, vector<8x32xf32>
    tpu.vector_store %arg5[%c0_6, %c0_7], %4 {strides = array<i32>} : memref<8x32xf32, #tpu.memory_space<vmem>>, vector<8x32xf32>,
    return
  }
  func.func @transform_0(%arg0: i32, %arg1: i32) -> (i32, i32) {
    %c0_i32 = arith.constant 0 : i32
    %c0_i32_0 = arith.constant 0 : i32
    return %arg0, %c0_i32 : i32, i32
  }
  func.func @transform_1(%arg0: i32, %arg1: i32) -> (i32, i32) {
    %c0_i32 = arith.constant 0 : i32
    %c0_i32_0 = arith.constant 0 : i32
    %c0_i32_1 = arith.constant 0 : i32
    return %c0_i32, %c0_i32_0 : i32, i32
  }
  func.func @transform_2(%arg0: i32, %arg1: i32) -> (i32, i32) {
    %c0_i32 = arith.constant 0 : i32
    %c0_i32_0 = arith.constant 0 : i32
    return %c0_i32, %arg1 : i32, i32
  }
  func.func @transform_3(%arg0: i32, %arg1: i32) -> (i32, i32) {
    %c0_i32 = arith.constant 0 : i32
    return %arg0, %arg1 : i32, i32
  }
}

</mosaic_0001>

<llo_original>
// kernel: tpu_custom_call.1
$region0: #{tpu_custom_call.1}
  #allocation0 [shape = 'u32[]', space=smem, size = 0x4, offset = 0x4, fixed_abs, tag = 'smem constant byte address 0x4 - core index']
  #allocation1 [shape = 'u32[144,128]{1,0:T(1,128)}', space=vmem, size = 0x12000, scoped, tag = 'internal scratch']
  %s0 = inlined_call_operand.vmem [shape: f32[16,32], index: 0, kind: input, shape index: {}]
  %s1 = inlined_call_operand.vmem [shape: f32[32,12], index: 1, kind: input, shape index: {}]
  %s2 = inlined_call_operand.vmem [shape: f32[12,32], index: 2, kind: input, shape index: {}]
  %s3 = inlined_call_operand.hbm [shape: f32[16,32], index: 3, kind: output, shape index: {}]
  %s4 = sld [smem:[#allocation0]]
  $region45: #{tpu_custom_call.1} parent=0
    _
  %s6 = ssub.s32 1, %s4
  %s7 = scalar_select 0, %s6, %s4
  $region1: #{tpu_custom_call.1} parent=0
    #allocation2 [shape = 'u8[8192]{0}', space=vmem, size = 0x2000, scoped, tag = 'output window, operand 0']
    #allocation3 [shape = 's32[2]{0}', space=sflag, size = 0x8, scoped, tag = 'scoped memory for tpu_custom_call.1']
    %8 = vsyncpa [#allocation3], 0
    %s9 = scalar_lea.sflag [#allocation3], 1
    %10 = vsyncpa %s9, 0
    loop: start=0, step=1, limit=4
    $region2: #{tpu_custom_call.1} parent=1 // loop_pre_header
      _
    $region3: #{tpu_custom_call.1} parent=1 // loop_header
      %s12 = sphi 0, %s16
      %p13 = scmp.ge.s32.totalorder %s12, 4
      %s19 = sphi 0, %s31
      %s20 = sphi 0, %s27
      %s21 = sphi 0, %s19
      %s22 = sphi 0, %s20
      %s23 = sphi 0, %s21
      %s24 = sphi 0, %s22
      %s34 = sphi 0, %s36
      %s37 = sphi 0, %s34
      %s38 = sphi 0, %s37
      %s54 = sphi 0, %s38
      %s58 = sphi 0, %s58
      %s60 = sphi 0, %s58
      %s61 = sphi 0, %s60
      %s75 = sphi 0, %s61
      %s81 = sphi 0, %s83
      %s84 = sphi 0, %s81
      %s85 = sphi 0, %s84
      %s101 = sphi 0, %s85
      %s109 = sphi 0, %s111
      %s112 = sphi 0, %s109
      %s113 = sphi 0, %s112
      %s129 = sphi 0, %s113
    $region4: #{tpu_custom_call.1} parent=1 // loop_header_branch
      %15 = sbr.rel (%p13) target = $region8
    $region5: #{tpu_custom_call.1} parent=1 // loop_body
      %s17 = ssub.s32 %s12, 1
      %s18 = ssub.s32 %s12, 2
      %s25 = sadd.s32 1, %s20
      %p26 = scmp.ge.s32.totalorder %s25, 1
      %s27 = scalar_select %p26, 0, %s25
      %s28 = sadd.s32 1, %s19
      %s29 = scalar_select %p26, %s28, %s19
      %p30 = scmp.ge.s32.totalorder %s29, 2
      %s31 = scalar_select %p30, 0, %s29
      %s32 = ssub.s32 %s19, %s31
      %p33 = scmp.eq.s32.totalorder %s32, 0
      %s35 = sadd.s32 %s34, 1
      %s36 = scalar_select %p33, %s34, %s35
      %p39 = pneg %p33
      %p40 = scmp.eq.s32.totalorder %s12, 1
      %p41 = por %p39, %p40
      %p42 = scmp.ne.s32.totalorder %s34, %s37
      %p43 = scmp.eq.s32.totalorder %s12, 0
      %p44 = por %p42, %p43
      %p45 = scmp.ne.s32.totalorder %s34, %s37
      %p46 = scmp.eq.s32.totalorder %s17, 1
      %p47 = por %p45, %p46
      %p48 = scmp.ne.s32.totalorder %s37, %s38
      %p49 = scmp.eq.s32.totalorder %s17, 0
      %p50 = por %p48, %p49
      %p51 = scmp.ne.s32.totalorder %s37, %s38
      %p52 = scmp.eq.s32.totalorder %s18, 1
      %p53 = por %p51, %p52
      %p55 = scmp.ne.s32.totalorder %s38, %s54
      %p56 = scmp.eq.s32.totalorder %s18, 0
      %p57 = por %p55, %p56
      %s59 = sadd.s32 %s58, 1
      %p62 = scmp.eq.s32.totalorder %s12, 1
      %p63 = scmp.ne.s32.totalorder %s58, %s60
      %p64 = scmp.eq.s32.totalorder %s12, 0
      %p65 = por %p63, %p64
      %p66 = scmp.ne.s32.totalorder %s58, %s60
      %p67 = scmp.eq.s32.totalorder %s17, 1
      %p68 = por %p66, %p67
      %p69 = scmp.ne.s32.totalorder %s60, %s61
      %p70 = scmp.eq.s32.totalorder %s17, 0
      %p71 = por %p69, %p70
      %p72 = scmp.ne.s32.totalorder %s60, %s61
      %p73 = scmp.eq.s32.totalorder %s18, 1
      %p74 = por %p72, %p73
      %p76 = scmp.ne.s32.totalorder %s61, %s75
      %p77 = scmp.eq.s32.totalorder %s18, 0
      %p78 = por %p76, %p77
      %s79 = ssub.s32 %s20, %s27
      %p80 = scmp.eq.s32.totalorder %s79, 0
      %s82 = sadd.s32 %s81, 1
      %s83 = scalar_select %p80, %s81, %s82
      %p86 = pneg %p80
      %p87 = scmp.eq.s32.totalorder %s12, 1
      %p88 = por %p86, %p87
      %p89 = scmp.ne.s32.totalorder %s81, %s84
      %p90 = scmp.eq.s32.totalorder %s12, 0
      %p91 = por %p89, %p90
      %p92 = scmp.ne.s32.totalorder %s81, %s84
      %p93 = scmp.eq.s32.totalorder %s17, 1
      %p94 = por %p92, %p93
      %p95 = scmp.ne.s32.totalorder %s84, %s85
      %p96 = scmp.eq.s32.totalorder %s17, 0
      %p97 = por %p95, %p96
      %p98 = scmp.ne.s32.totalorder %s84, %s85
      %p99 = scmp.eq.s32.totalorder %s18, 1
      %p100 = por %p98, %p99
      %p102 = scmp.ne.s32.totalorder %s85, %s101
      %p103 = scmp.eq.s32.totalorder %s18, 0
      %p104 = por %p102, %p103
      %s105 = ssub.s32 %s19, %s31
      %s106 = ssub.s32 %s20, %s27
      %s107 = sor.u32 %s105, %s106
      %p108 = scmp.eq.s32.totalorder %s107, 0
      %s110 = sadd.s32 %s109, 1
      %s111 = scalar_select %p108, %s109, %s110
      %p114 = pneg %p108
      %p115 = scmp.eq.s32.totalorder %s12, 1
      %p116 = por %p114, %p115
      %p117 = scmp.ne.s32.totalorder %s109, %s112
      %p118 = scmp.eq.s32.totalorder %s12, 0
      %p119 = por %p117, %p118
      %p120 = scmp.ne.s32.totalorder %s109, %s112
      %p121 = scmp.eq.s32.totalorder %s17, 1
      %p122 = por %p120, %p121
      %p123 = scmp.ne.s32.totalorder %s112, %s113
      %p124 = scmp.eq.s32.totalorder %s17, 0
      %p125 = por %p123, %p124
      %p126 = scmp.ne.s32.totalorder %s112, %s113
      %p127 = scmp.eq.s32.totalorder %s18, 1
      %p128 = por %p126, %p127
      %p130 = scmp.ne.s32.totalorder %s113, %s129
      %p131 = scmp.eq.s32.totalorder %s18, 0
      %p132 = por %p130, %p131
      %p133 = scmp.le.s32.totalorder 1, %s12
      %p134 = scmp.lt.s32.totalorder %s12, 3
      %p135 = pnand %p133, %p134
      %p136 = pneg %p135
      // Predicated region
      $region9: #{tpu_custom_call.1} parent=5 // pred_check
        _
      $region10: #{tpu_custom_call.1} parent=5 // pred_check_branch
        %138 = sbr.rel (%p135) target = $region12
      $region11: #{tpu_custom_call.1} parent=5 // pred_region
        %s139 = ssub.s32 %s12, 1
        // Predicated region
        $region13: #{tpu_custom_call.1} parent=11 // pred_check
          %p140 = pneg %p71
        $region14: #{tpu_custom_call.1} parent=11 // pred_check_branch
          %142 = sbr.rel (%p140) target = $region16
        $region15: #{tpu_custom_call.1} parent=11 // pred_region
          _
        $region16: #{tpu_custom_call.1} parent=11 // pred_fallthru
          _
        // Predicated region
        $region17: #{tpu_custom_call.1} parent=11 // pred_check
          %p143 = pneg %p97
        $region18: #{tpu_custom_call.1} parent=11 // pred_check_branch
          %145 = sbr.rel (%p143) target = $region20
        $region19: #{tpu_custom_call.1} parent=11 // pred_region
          %p146 = scmp.lt.s32.totalorder %s22, 0
          %s147 = scalar_select %p146, %s22, 0
          %s148 = smul.addr %s147, 8
          %s149 = scalar_lea.vmem %s2, %s148
        $region20: #{tpu_custom_call.1} parent=11 // pred_fallthru
          _
      $region12: #{tpu_custom_call.1} parent=5 // pred_fallthru
        _
      %p150 = scmp.lt.s32.totalorder %s12, 2
      // Predicated region
      $region21: #{tpu_custom_call.1} parent=5 // pred_check
        %p151 = pneg %p150
      $region22: #{tpu_custom_call.1} parent=5 // pred_check_branch
        %153 = sbr.rel (%p151) target = $region24
      $region23: #{tpu_custom_call.1} parent=5 // pred_region
        // Predicated region
        $region25: #{tpu_custom_call.1} parent=23 // pred_check
          %p154 = pneg %p44
        $region26: #{tpu_custom_call.1} parent=23 // pred_check_branch
          %156 = sbr.rel (%p154) target = $region28
        $region27: #{tpu_custom_call.1} parent=23 // pred_region
          %p157 = scmp.lt.s32.totalorder %s19, 1
          %s158 = scalar_select %p157, %s19, 1
          %s159 = smul.addr %s158, 8
          %s160 = scalar_lea.vmem %s0, %s159
        $region28: #{tpu_custom_call.1} parent=23 // pred_fallthru
          _
      $region24: #{tpu_custom_call.1} parent=5 // pred_fallthru
        _
      %p161 = scmp.le.s32.totalorder 1, %s12
      %p162 = scmp.lt.s32.totalorder %s12, 3
      %p163 = pnand %p161, %p162
      %p164 = pneg %p163
      // Predicated region
      $region29: #{tpu_custom_call.1} parent=5 // pred_check
        _
      $region30: #{tpu_custom_call.1} parent=5 // pred_check_branch
        %166 = sbr.rel (%p163) target = $region32
      $region31: #{tpu_custom_call.1} parent=5 // pred_region
        %s167 = ssub.s32 %s12, 1
        %p168 = scmp.lt.s32.totalorder %s21, 1
        %s169 = scalar_select %p168, %s21, 1
        %s170 = smul.addr %s169, 8
        %s171 = scalar_lea.vmem %s0, %s170
        %p172 = pneg %p50
        %p173 = pneg %p47
        %p174 = pneg %p71
        %p175 = pneg %p68
        %p176 = scmp.lt.s32.totalorder %s22, 0
        %s177 = scalar_select %p176, %s22, 0
        %s178 = smul.addr %s177, 8
        %s179 = scalar_lea.vmem %s2, %s178
        %p180 = pneg %p97
        %p181 = pneg %p94
        %p182 = pneg %p125
        %p183 = pneg %p122
        %s184 = sand.u32 %s112, 1
        %s185 = scalar_lea.sflag [#allocation3], %s184
        %s186 = sand.u32 %s112, 1
        %s187 = smul.addr %s186, 8
        %s188 = scalar_lea.vmem [#allocation2], %s187
        %p189 = scmp.lt.s32.totalorder %s21, 1
        %s190 = scalar_select %p189, %s21, 1
        %s191 = smul.addr %s190, 8
        %s192 = scalar_lea.vmem %s0, %s191
        %p193 = scmp.lt.s32.totalorder %s22, 0
        %s194 = scalar_select %p193, %s22, 0
        %s195 = smul.addr %s194, 8
        %s196 = scalar_lea.vmem %s2, %s195
        %v197 = vld [vmem:[%s192] sm:$0xff]
        %v198 = vld [vmem:[%s1] sm:$0xff]
        %v199 = vld [vmem:[%s1 + $0x8] sm:$0xff]
        %v200 = vld [vmem:[%s1 + $0x10] sm:$0xff]
        %v201 = vld [vmem:[%s1 + $0x18] sm:$0xff]
        %vm202 = vcmask 261120
        %v204 = vsel %vm202, %v197, 0
        %206 = vmatprep.subr.mxu0 0.0
        %207 = vmatpush1.msra.mxu0 %v198
        %208 = vmatprep.subr.mxu0 0.0
        %209 = vmatpush1.msra.mxu0 %v199
        %210 = vmatprep.subr.mxu0 0.0
        %211 = vmatpush1.msra.mxu0 %v200
        %212 = vmatprep.subr.mxu0 0.0
        %213 = vmatpush1.msra.mxu0 %v201
        %214 = vmatprep.subr.mxu0 0.0
        %215 = vmatpush1.msra.mxu0 0.0
        %216 = vmatprep.subr.mxu0 0.0
        %217 = vmatpush1.msra.mxu0 0.0
        %218 = vmatprep.subr.mxu0 0.0
        %219 = vmatpush1.msra.mxu0 0.0
        %220 = vmatprep.subr.mxu0 0.0
        %221 = vmatpush1.msra.mxu0 0.0
        %222 = vmatprep.subr.mxu0 0.0
        %223 = vmatpush1.msra.mxu0 0.0
        %224 = vmatprep.subr.mxu0 0.0
        %225 = vmatpush1.msra.mxu0 0.0
        %226 = vmatprep.subr.mxu0 0.0
        %227 = vmatpush1.msra.mxu0 0.0
        %228 = vmatprep.subr.mxu0 0.0
        %229 = vmatpush1.msra.mxu0 0.0
        %230 = vmatprep.subr.mxu0 0.0
        %231 = vmatpush1.msra.mxu0 0.0
        %232 = vmatprep.subr.mxu0 0.0
        %233 = vmatpush1.msra.mxu0 0.0
        %234 = vmatprep.subr.mxu0 0.0
        %235 = vmatpush1.msra.mxu0 0.0
        %236 = vmatprep.subr.mxu0 0.0
        %237 = vmatpush1.msra.mxu0 0.0
        %238 = vmatprep.subr.mxu0 0.0
        %239 = vmatpush1.msra.mxu0 0.0
        %240 = vmatprep.subr.mxu0 0.0
        %241 = vmatpush1.msra.mxu0 0.0
        %242 = vmatprep.subr.mxu0 0.0
        %243 = vmatpush1.msra.mxu0 0.0
        %244 = vmatprep.subr.mxu0 0.0
        %245 = vmatpush1.msra.mxu0 0.0
        %246 = vmatprep.subr.mxu0 0.0
        %247 = vmatpush1.msra.mxu0 0.0
        %248 = vmatprep.subr.mxu0 0.0
        %249 = vmatpush1.msra.mxu0 0.0
        %250 = vmatprep.subr.mxu0 0.0
        %251 = vmatpush1.msra.mxu0 0.0
        %252 = vmatprep.subr.mxu0 0.0
        %253 = vmatpush1.msra.mxu0 0.0
        %254 = vmatprep.subr.mxu0 0.0
        %255 = vmatpush1.msra.mxu0 0.0
        %256 = vmatprep.subr.mxu0 0.0
        %257 = vmatpush1.msra.mxu0 0.0
        %258 = vmatprep.subr.mxu0 0.0
        %259 = vmatpush1.msra.mxu0 0.0
        %260 = vmatprep.subr.mxu0 0.0
        %261 = vmatpush1.msra.mxu0 0.0
        %262 = vmatprep.subr.mxu0 0.0
        %263 = vmatpush1.msra.mxu0 0.0
        %264 = vmatprep.subr.mxu0 0.0
        %265 = vmatpush1.msra.mxu0 0.0
        %266 = vmatprep.subr.mxu0 0.0
        %267 = vmatpush1.msra.mxu0 0.0
        %268 = vmatprep.subr.mxu0 0.0
        %269 = vmatpush1.msra.mxu0 0.0
        %270 = vmatprep.mubr.f32.mxu0 0.0
        %271 = vmatmul.mubr.f32.gmra.mrb[0].mxu0 %v204
        %v272 = vpop.f32.mrb[0].mxu0
        %v273 = vadd.f32 0.0, %v272
        %v274 = vpop.f32.mrb[0].mxu0
        %275 = vdwg.mxu0
        %v276 = vld [vmem:[%s196] sm:$0xff]
        %v277 = vld [vmem:[%s196 + $0x8] sm:$0xf]
        %vm278 = vcmask 97280
        %v280 = vsel %vm278, %v273, 0
        %vm282 = vcmask 1043456
        %v284 = vsel %vm282, %v277, 0
        %286 = vmatprep.subr.mxu0 0.0
        %287 = vmatpush1.msra.mxu0 %v276
        %288 = vmatprep.subr.mxu0 0.0
        %289 = vmatpush1.msra.mxu0 %v284
        %290 = vmatprep.subr.mxu0 0.0
        %291 = vmatpush1.msra.mxu0 0.0
        %292 = vmatprep.subr.mxu0 0.0
        %293 = vmatpush1.msra.mxu0 0.0
        %294 = vmatprep.subr.mxu0 0.0
        %295 = vmatpush1.msra.mxu0 0.0
        %296 = vmatprep.subr.mxu0 0.0
        %297 = vmatpush1.msra.mxu0 0.0
        %298 = vmatprep.subr.mxu0 0.0
        %299 = vmatpush1.msra.mxu0 0.0
        %300 = vmatprep.subr.mxu0 0.0
        %301 = vmatpush1.msra.mxu0 0.0
        %302 = vmatprep.subr.mxu0 0.0
        %303 = vmatpush1.msra.mxu0 0.0
        %304 = vmatprep.subr.mxu0 0.0
        %305 = vmatpush1.msra.mxu0 0.0
        %306 = vmatprep.subr.mxu0 0.0
        %307 = vmatpush1.msra.mxu0 0.0
        %308 = vmatprep.subr.mxu0 0.0
        %309 = vmatpush1.msra.mxu0 0.0
        %310 = vmatprep.subr.mxu0 0.0
        %311 = vmatpush1.msra.mxu0 0.0
        %312 = vmatprep.subr.mxu0 0.0
        %313 = vmatpush1.msra.mxu0 0.0
        %314 = vmatprep.subr.mxu0 0.0
        %315 = vmatpush1.msra.mxu0 0.0
        %316 = vmatprep.subr.mxu0 0.0
        %317 = vmatpush1.msra.mxu0 0.0
        %318 = vmatprep.subr.mxu0 0.0
        %319 = vmatpush1.msra.mxu0 0.0
        %320 = vmatprep.subr.mxu0 0.0
        %321 = vmatpush1.msra.mxu0 0.0
        %322 = vmatprep.subr.mxu0 0.0
        %323 = vmatpush1.msra.mxu0 0.0
        %324 = vmatprep.subr.mxu0 0.0
        %325 = vmatpush1.msra.mxu0 0.0
        %326 = vmatprep.subr.mxu0 0.0
        %327 = vmatpush1.msra.mxu0 0.0
        %328 = vmatprep.subr.mxu0 0.0
        %329 = vmatpush1.msra.mxu0 0.0
        %330 = vmatprep.subr.mxu0 0.0
        %331 = vmatpush1.msra.mxu0 0.0
        %332 = vmatprep.subr.mxu0 0.0
        %333 = vmatpush1.msra.mxu0 0.0
        %334 = vmatprep.subr.mxu0 0.0
        %335 = vmatpush1.msra.mxu0 0.0
        %336 = vmatprep.subr.mxu0 0.0
        %337 = vmatpush1.msra.mxu0 0.0
        %338 = vmatprep.subr.mxu0 0.0
        %339 = vmatpush1.msra.mxu0 0.0
        %340 = vmatprep.subr.mxu0 0.0
        %341 = vmatpush1.msra.mxu0 0.0
        %342 = vmatprep.subr.mxu0 0.0
        %343 = vmatpush1.msra.mxu0 0.0
        %344 = vmatprep.subr.mxu0 0.0
        %345 = vmatpush1.msra.mxu0 0.0
        %346 = vmatprep.subr.mxu0 0.0
        %347 = vmatpush1.msra.mxu0 0.0
        %348 = vmatprep.subr.mxu0 0.0
        %349 = vmatpush1.msra.mxu0 0.0
        %350 = vmatprep.mubr.f32.mxu0 0.0
        %351 = vmatmul.mubr.f32.gmra.mrb[0].mxu0 %v280
        %v352 = vpop.f32.mrb[0].mxu0
        %v353 = vadd.f32 0.0, %v352
        %v354 = vpop.f32.mrb[0].mxu0
        %355 = vdwg.mxu0
        %356 = vst.msk [vmem:[%s188] sm:$0xff] %vm202, %v353
        %s357 = sand.u32 %s112, 1
        %s358 = scalar_lea.sflag [#allocation3], %s357
        %s359 = sand.u32 %s112, 1
        %s360 = smul.addr %s359, 8
        %s361 = scalar_lea.vmem [#allocation2], %s360
        // Predicated region
        $region33: #{tpu_custom_call.1} parent=31 // pred_check
          %p362 = pneg %p122
        $region34: #{tpu_custom_call.1} parent=31 // pred_check_branch
          %364 = sbr.rel (%p362) target = $region36
        $region35: #{tpu_custom_call.1} parent=31 // pred_region
          %s366 = ssub.s32 128, 128
          %367 = vsyncadd %s358, %s366
          %s368 = sadd.s32 %s22, %s21
          %s369 = smul.addr %s368, 128
          %s370 = scalar_lea.hbm %s3, %s369
          %s372 = sshll.u32 %s361, 4
          %s373 = int_to_ptr.vmem [resolvable:$true] %s372
          %375 = dma.vmem_to_hbm [thread:$0]  %s373, 128, %s370, %s358
        $region36: #{tpu_custom_call.1} parent=31 // pred_fallthru
          _
      $region32: #{tpu_custom_call.1} parent=5 // pred_fallthru
        _
      %p376 = scmp.le.s32.totalorder 2, %s12
      // Predicated region
      $region37: #{tpu_custom_call.1} parent=5 // pred_check
        %p377 = pneg %p376
      $region38: #{tpu_custom_call.1} parent=5 // pred_check_branch
        %379 = sbr.rel (%p377) target = $region40
      $region39: #{tpu_custom_call.1} parent=5 // pred_region
        %s380 = ssub.s32 %s12, 2
        // Predicated region
        $region41: #{tpu_custom_call.1} parent=39 // pred_check
          %p381 = pneg %p128
        $region42: #{tpu_custom_call.1} parent=39 // pred_check_branch
          %383 = sbr.rel (%p381) target = $region44
        $region43: #{tpu_custom_call.1} parent=39 // pred_region
          %s384 = sand.u32 %s113, 1
          %s385 = scalar_lea.sflag [#allocation3], %s384
          %s386 = sand.u32 %s113, 1
          %s387 = smul.addr %s386, 8
          %s388 = scalar_lea.vmem [#allocation2], %s387
          %389 = dma.done %s385, 128
        $region44: #{tpu_custom_call.1} parent=39 // pred_fallthru
          _
      $region40: #{tpu_custom_call.1} parent=5 // pred_fallthru
        _
    $region6: #{tpu_custom_call.1} parent=1 // loop_footer
      %s16 = sadd.s32 1, %s12
    $region7: #{tpu_custom_call.1} parent=1 // loop_footer_branch
      %11 = sbr.rel target = $region3
    $region8: #{tpu_custom_call.1} parent=1 // loop_exit
      _
    %390 = vsyncpa [#allocation3], 1
    %s391 = scalar_lea.sflag [#allocation3], 1
    %392 = vsyncpa %s391, 1

// kernel: tpu_custom_call.1
$region0: #{tpu_custom_call.1}
  #allocation0 [shape = 'u32[]', space=smem, size = 0x4, offset = 0x4, fixed_abs, tag = 'smem constant byte address 0x4 - core index']
  #allocation1 [shape = 'u32[144,128]{1,0:T(1,128)}', space=vmem, size = 0x12000, scoped, tag = 'internal scratch']
  %s0 = inlined_call_operand.vmem [shape: f32[16,32], index: 0, kind: input, shape index: {}]
  %s1 = inlined_call_operand.vmem [shape: f32[32,12], index: 1, kind: input, shape index: {}]
  %s2 = inlined_call_operand.vmem [shape: f32[12,32], index: 2, kind: input, shape index: {}]
  %s3 = inlined_call_operand.hbm [shape: f32[16,32], index: 3, kind: output, shape index: {}]
  %s4 = sld [smem:[#allocation0]]
  $region45: #{tpu_custom_call.1} parent=0
    _
  %s6 = ssub.s32 1, %s4
  %s7 = scalar_select 0, %s6, %s4
  $region1: #{tpu_custom_call.1} parent=0
    #allocation2 [shape = 'u8[8192]{0}', space=vmem, size = 0x2000, scoped, tag = 'output window, operand 0']
    #allocation3 [shape = 's32[2]{0}', space=sflag, size = 0x8, scoped, tag = 'scoped memory for tpu_custom_call.1']
    %8 = vsyncpa [#allocation3], 0
    %s9 = scalar_lea.sflag [#allocation3], 1
    %10 = vsyncpa %s9, 0
    loop: start=0, step=1, limit=4
    $region2: #{tpu_custom_call.1} parent=1 // loop_pre_header
      _
    $region3: #{tpu_custom_call.1} parent=1 // loop_header
      %s12 = sphi 0, %s16
      %p13 = scmp.ge.s32.totalorder %s12, 4
      %s19 = sphi 0, %s31
      %s20 = sphi 0, %s27
      %s21 = sphi 0, %s19
      %s22 = sphi 0, %s20
      %s23 = sphi 0, %s21
      %s24 = sphi 0, %s22
      %s34 = sphi 0, %s36
      %s37 = sphi 0, %s34
      %s38 = sphi 0, %s37
      %s54 = sphi 0, %s38
      %s58 = sphi 0, %s58
      %s60 = sphi 0, %s58
      %s61 = sphi 0, %s60
      %s75 = sphi 0, %s61
      %s81 = sphi 0, %s83
      %s84 = sphi 0, %s81
      %s85 = sphi 0, %s84
      %s101 = sphi 0, %s85
      %s109 = sphi 0, %s111
      %s112 = sphi 0, %s109
      %s113 = sphi 0, %s112
      %s129 = sphi 0, %s113
    $region4: #{tpu_custom_call.1} parent=1 // loop_header_branch
      %15 = sbr.rel (%p13) target = $region8
    $region5: #{tpu_custom_call.1} parent=1 // loop_body
      %s17 = ssub.s32 %s12, 1
      %s18 = ssub.s32 %s12, 2
      %s25 = sadd.s32 1, %s20
      %p26 = scmp.ge.s32.totalorder %s25, 1
      %s27 = scalar_select %p26, 0, %s25
      %s28 = sadd.s32 1, %s19
      %s29 = scalar_select %p26, %s28, %s19
      %p30 = scmp.ge.s32.totalorder %s29, 2
      %s31 = scalar_select %p30, 0, %s29
      %s32 = ssub.s32 %s19, %s31
      %p33 = scmp.eq.s32.totalorder %s32, 0
      %s35 = sadd.s32 %s34, 1
      %s36 = scalar_select %p33, %s34, %s35
      %p39 = pneg %p33
      %p40 = scmp.eq.s32.totalorder %s12, 1
      %p41 = por %p39, %p40
      %p42 = scmp.ne.s32.totalorder %s34, %s37
      %p43 = scmp.eq.s32.totalorder %s12, 0
      %p44 = por %p42, %p43
      %p45 = scmp.ne.s32.totalorder %s34, %s37
      %p46 = scmp.eq.s32.totalorder %s17, 1
      %p47 = por %p45, %p46
      %p48 = scmp.ne.s32.totalorder %s37, %s38
      %p49 = scmp.eq.s32.totalorder %s17, 0
      %p50 = por %p48, %p49
      %p51 = scmp.ne.s32.totalorder %s37, %s38
      %p52 = scmp.eq.s32.totalorder %s18, 1
      %p53 = por %p51, %p52
      %p55 = scmp.ne.s32.totalorder %s38, %s54
      %p56 = scmp.eq.s32.totalorder %s18, 0
      %p57 = por %p55, %p56
      %s59 = sadd.s32 %s58, 1
      %p62 = scmp.eq.s32.totalorder %s12, 1
      %p63 = scmp.ne.s32.totalorder %s58, %s60
      %p64 = scmp.eq.s32.totalorder %s12, 0
      %p65 = por %p63, %p64
      %p66 = scmp.ne.s32.totalorder %s58, %s60
      %p67 = scmp.eq.s32.totalorder %s17, 1
      %p68 = por %p66, %p67
      %p69 = scmp.ne.s32.totalorder %s60, %s61
      %p70 = scmp.eq.s32.totalorder %s17, 0
      %p71 = por %p69, %p70
      %p72 = scmp.ne.s32.totalorder %s60, %s61
      %p73 = scmp.eq.s32.totalorder %s18, 1
      %p74 = por %p72, %p73
      %p76 = scmp.ne.s32.totalorder %s61, %s75
      %p77 = scmp.eq.s32.totalorder %s18, 0
      %p78 = por %p76, %p77
      %s79 = ssub.s32 %s20, %s27
      %p80 = scmp.eq.s32.totalorder %s79, 0
      %s82 = sadd.s32 %s81, 1
      %s83 = scalar_select %p80, %s81, %s82
      %p86 = pneg %p80
      %p87 = scmp.eq.s32.totalorder %s12, 1
      %p88 = por %p86, %p87
      %p89 = scmp.ne.s32.totalorder %s81, %s84
      %p90 = scmp.eq.s32.totalorder %s12, 0
      %p91 = por %p89, %p90
      %p92 = scmp.ne.s32.totalorder %s81, %s84
      %p93 = scmp.eq.s32.totalorder %s17, 1
      %p94 = por %p92, %p93
      %p95 = scmp.ne.s32.totalorder %s84, %s85
      %p96 = scmp.eq.s32.totalorder %s17, 0
      %p97 = por %p95, %p96
      %p98 = scmp.ne.s32.totalorder %s84, %s85
      %p99 = scmp.eq.s32.totalorder %s18, 1
      %p100 = por %p98, %p99
      %p102 = scmp.ne.s32.totalorder %s85, %s101
      %p103 = scmp.eq.s32.totalorder %s18, 0
      %p104 = por %p102, %p103
      %s105 = ssub.s32 %s19, %s31
      %s106 = ssub.s32 %s20, %s27
      %s107 = sor.u32 %s105, %s106
      %p108 = scmp.eq.s32.totalorder %s107, 0
      %s110 = sadd.s32 %s109, 1
      %s111 = scalar_select %p108, %s109, %s110
      %p114 = pneg %p108
      %p115 = scmp.eq.s32.totalorder %s12, 1
      %p116 = por %p114, %p115
      %p117 = scmp.ne.s32.totalorder %s109, %s112
      %p118 = scmp.eq.s32.totalorder %s12, 0
      %p119 = por %p117, %p118
      %p120 = scmp.ne.s32.totalorder %s109, %s112
      %p121 = scmp.eq.s32.totalorder %s17, 1
      %p122 = por %p120, %p121
      %p123 = scmp.ne.s32.totalorder %s112, %s113
      %p124 = scmp.eq.s32.totalorder %s17, 0
      %p125 = por %p123, %p124
      %p126 = scmp.ne.s32.totalorder %s112, %s113
      %p127 = scmp.eq.s32.totalorder %s18, 1
      %p128 = por %p126, %p127
      %p130 = scmp.ne.s32.totalorder %s113, %s129
      %p131 = scmp.eq.s32.totalorder %s18, 0
      %p132 = por %p130, %p131
      %p133 = scmp.le.s32.totalorder 1, %s12
      %p134 = scmp.lt.s32.totalorder %s12, 3
      %p135 = pnand %p133, %p134
      %p136 = pneg %p135
      // Predicated region
      $region9: #{tpu_custom_call.1} parent=5 // pred_check
        _
      $region10: #{tpu_custom_call.1} parent=5 // pred_check_branch
        %138 = sbr.rel (%p135) target = $region12
      $region11: #{tpu_custom_call.1} parent=5 // pred_region
        %s139 = ssub.s32 %s12, 1
        // Predicated region
        $region13: #{tpu_custom_call.1} parent=11 // pred_check
          %p140 = pneg %p71
        $region14: #{tpu_custom_call.1} parent=11 // pred_check_branch
          %142 = sbr.rel (%p140) target = $region16
        $region15: #{tpu_custom_call.1} parent=11 // pred_region
          _
        $region16: #{tpu_custom_call.1} parent=11 // pred_fallthru
          _
        // Predicated region
        $region17: #{tpu_custom_call.1} parent=11 // pred_check
          %p143 = pneg %p97
        $region18: #{tpu_custom_call.1} parent=11 // pred_check_branch
          %145 = sbr.rel (%p143) target = $region20
        $region19: #{tpu_custom_call.1} parent=11 // pred_region
          %p146 = scmp.lt.s32.totalorder %s22, 0
          %s147 = scalar_select %p146, %s22, 0
          %s148 = smul.addr %s147, 8
          %s149 = scalar_lea.vmem %s2, %s148
        $region20: #{tpu_custom_call.1} parent=11 // pred_fallthru
          _
      $region12: #{tpu_custom_call.1} parent=5 // pred_fallthru
        _
      %p150 = scmp.lt.s32.totalorder %s12, 2
      // Predicated region
      $region21: #{tpu_custom_call.1} parent=5 // pred_check
        %p151 = pneg %p150
      $region22: #{tpu_custom_call.1} parent=5 // pred_check_branch
        %153 = sbr.rel (%p151) target = $region24
      $region23: #{tpu_custom_call.1} parent=5 // pred_region
        // Predicated region
        $region25: #{tpu_custom_call.1} parent=23 // pred_check
          %p154 = pneg %p44
        $region26: #{tpu_custom_call.1} parent=23 // pred_check_branch
          %156 = sbr.rel (%p154) target = $region28
        $region27: #{tpu_custom_call.1} parent=23 // pred_region
          %p157 = scmp.lt.s32.totalorder %s19, 1
          %s158 = scalar_select %p157, %s19, 1
          %s159 = smul.addr %s158, 8
          %s160 = scalar_lea.vmem %s0, %s159
        $region28: #{tpu_custom_call.1} parent=23 // pred_fallthru
          _
      $region24: #{tpu_custom_call.1} parent=5 // pred_fallthru
        _
      %p161 = scmp.le.s32.totalorder 1, %s12
      %p162 = scmp.lt.s32.totalorder %s12, 3
      %p163 = pnand %p161, %p162
      %p164 = pneg %p163
      // Predicated region
      $region29: #{tpu_custom_call.1} parent=5 // pred_check
        _
      $region30: #{tpu_custom_call.1} parent=5 // pred_check_branch
        %166 = sbr.rel (%p163) target = $region32
      $region31: #{tpu_custom_call.1} parent=5 // pred_region
        %s167 = ssub.s32 %s12, 1
        %p168 = scmp.lt.s32.totalorder %s21, 1
        %s169 = scalar_select %p168, %s21, 1
        %s170 = smul.addr %s169, 8
        %s171 = scalar_lea.vmem %s0, %s170
        %p172 = pneg %p50
        %p173 = pneg %p47
        %p174 = pneg %p71
        %p175 = pneg %p68
        %p176 = scmp.lt.s32.totalorder %s22, 0
        %s177 = scalar_select %p176, %s22, 0
        %s178 = smul.addr %s177, 8
        %s179 = scalar_lea.vmem %s2, %s178
        %p180 = pneg %p97
        %p181 = pneg %p94
        %p182 = pneg %p125
        %p183 = pneg %p122
        %s184 = sand.u32 %s112, 1
        %s185 = scalar_lea.sflag [#allocation3], %s184
        %s186 = sand.u32 %s112, 1
        %s187 = smul.addr %s186, 8
        %s188 = scalar_lea.vmem [#allocation2], %s187
        %p189 = scmp.lt.s32.totalorder %s21, 1
        %s190 = scalar_select %p189, %s21, 1
        %s191 = smul.addr %s190, 8
        %s192 = scalar_lea.vmem %s0, %s191
        %p193 = scmp.lt.s32.totalorder %s22, 0
        %s194 = scalar_select %p193, %s22, 0
        %s195 = smul.addr %s194, 8
        %s196 = scalar_lea.vmem %s2, %s195
        %v197 = vld [vmem:[%s192] sm:$0xff]
        %v198 = vld [vmem:[%s1] sm:$0xff]
        %v199 = vld [vmem:[%s1 + $0x8] sm:$0xff]
        %v200 = vld [vmem:[%s1 + $0x10] sm:$0xff]
        %v201 = vld [vmem:[%s1 + $0x18] sm:$0xff]
        %vm202 = vcmask 261120
        %v204 = vsel %vm202, %v197, 0
        %206 = vmatprep.subr.mxu0 0.0
        %207 = vmatpush1.msra.mxu0 %v198
        %208 = vmatprep.subr.mxu0 0.0
        %209 = vmatpush1.msra.mxu0 %v199
        %210 = vmatprep.subr.mxu0 0.0
        %211 = vmatpush1.msra.mxu0 %v200
        %212 = vmatprep.subr.mxu0 0.0
        %213 = vmatpush1.msra.mxu0 %v201
        %214 = vmatprep.subr.mxu0 0.0
        %215 = vmatpush1.msra.mxu0 0.0
        %216 = vmatprep.subr.mxu0 0.0
        %217 = vmatpush1.msra.mxu0 0.0
        %218 = vmatprep.subr.mxu0 0.0
        %219 = vmatpush1.msra.mxu0 0.0
        %220 = vmatprep.subr.mxu0 0.0
        %221 = vmatpush1.msra.mxu0 0.0
        %222 = vmatprep.subr.mxu0 0.0
        %223 = vmatpush1.msra.mxu0 0.0
        %224 = vmatprep.subr.mxu0 0.0
        %225 = vmatpush1.msra.mxu0 0.0
        %226 = vmatprep.subr.mxu0 0.0
        %227 = vmatpush1.msra.mxu0 0.0
        %228 = vmatprep.subr.mxu0 0.0
        %229 = vmatpush1.msra.mxu0 0.0
        %230 = vmatprep.subr.mxu0 0.0
        %231 = vmatpush1.msra.mxu0 0.0
        %232 = vmatprep.subr.mxu0 0.0
        %233 = vmatpush1.msra.mxu0 0.0
        %234 = vmatprep.subr.mxu0 0.0
        %235 = vmatpush1.msra.mxu0 0.0
        %236 = vmatprep.subr.mxu0 0.0
        %237 = vmatpush1.msra.mxu0 0.0
        %238 = vmatprep.subr.mxu0 0.0
        %239 = vmatpush1.msra.mxu0 0.0
        %240 = vmatprep.subr.mxu0 0.0
        %241 = vmatpush1.msra.mxu0 0.0
        %242 = vmatprep.subr.mxu0 0.0
        %243 = vmatpush1.msra.mxu0 0.0
        %244 = vmatprep.subr.mxu0 0.0
        %245 = vmatpush1.msra.mxu0 0.0
        %246 = vmatprep.subr.mxu0 0.0
        %247 = vmatpush1.msra.mxu0 0.0
        %248 = vmatprep.subr.mxu0 0.0
        %249 = vmatpush1.msra.mxu0 0.0
        %250 = vmatprep.subr.mxu0 0.0
        %251 = vmatpush1.msra.mxu0 0.0
        %252 = vmatprep.subr.mxu0 0.0
        %253 = vmatpush1.msra.mxu0 0.0
        %254 = vmatprep.subr.mxu0 0.0
        %255 = vmatpush1.msra.mxu0 0.0
        %256 = vmatprep.subr.mxu0 0.0
        %257 = vmatpush1.msra.mxu0 0.0
        %258 = vmatprep.subr.mxu0 0.0
        %259 = vmatpush1.msra.mxu0 0.0
        %260 = vmatprep.subr.mxu0 0.0
        %261 = vmatpush1.msra.mxu0 0.0
        %262 = vmatprep.subr.mxu0 0.0
        %263 = vmatpush1.msra.mxu0 0.0
        %264 = vmatprep.subr.mxu0 0.0
        %265 = vmatpush1.msra.mxu0 0.0
        %266 = vmatprep.subr.mxu0 0.0
        %267 = vmatpush1.msra.mxu0 0.0
        %268 = vmatprep.subr.mxu0 0.0
        %269 = vmatpush1.msra.mxu0 0.0
        %270 = vmatprep.mubr.f32.mxu0 0.0
        %271 = vmatmul.mubr.f32.gmra.mrb[0].mxu0 %v204
        %v272 = vpop.f32.mrb[0].mxu0
        %v273 = vadd.f32 0.0, %v272
        %v274 = vpop.f32.mrb[0].mxu0
        %275 = vdwg.mxu0
        %v276 = vld [vmem:[%s196] sm:$0xff]
        %v277 = vld [vmem:[%s196 + $0x8] sm:$0xf]
        %vm278 = vcmask 97280
        %v280 = vsel %vm278, %v273, 0
        %vm282 = vcmask 1043456
        %v284 = vsel %vm282, %v277, 0
        %286 = vmatprep.subr.mxu0 0.0
        %287 = vmatpush1.msra.mxu0 %v276
        %288 = vmatprep.subr.mxu0 0.0
        %289 = vmatpush1.msra.mxu0 %v284
        %290 = vmatprep.subr.mxu0 0.0
        %291 = vmatpush1.msra.mxu0 0.0
        %292 = vmatprep.subr.mxu0 0.0
        %293 = vmatpush1.msra.mxu0 0.0
        %294 = vmatprep.subr.mxu0 0.0
        %295 = vmatpush1.msra.mxu0 0.0
        %296 = vmatprep.subr.mxu0 0.0
        %297 = vmatpush1.msra.mxu0 0.0
        %298 = vmatprep.subr.mxu0 0.0
        %299 = vmatpush1.msra.mxu0 0.0
        %300 = vmatprep.subr.mxu0 0.0
        %301 = vmatpush1.msra.mxu0 0.0
        %302 = vmatprep.subr.mxu0 0.0
        %303 = vmatpush1.msra.mxu0 0.0
        %304 = vmatprep.subr.mxu0 0.0
        %305 = vmatpush1.msra.mxu0 0.0
        %306 = vmatprep.subr.mxu0 0.0
        %307 = vmatpush1.msra.mxu0 0.0
        %308 = vmatprep.subr.mxu0 0.0
        %309 = vmatpush1.msra.mxu0 0.0
        %310 = vmatprep.subr.mxu0 0.0
        %311 = vmatpush1.msra.mxu0 0.0
        %312 = vmatprep.subr.mxu0 0.0
        %313 = vmatpush1.msra.mxu0 0.0
        %314 = vmatprep.subr.mxu0 0.0
        %315 = vmatpush1.msra.mxu0 0.0
        %316 = vmatprep.subr.mxu0 0.0
        %317 = vmatpush1.msra.mxu0 0.0
        %318 = vmatprep.subr.mxu0 0.0
        %319 = vmatpush1.msra.mxu0 0.0
        %320 = vmatprep.subr.mxu0 0.0
        %321 = vmatpush1.msra.mxu0 0.0
        %322 = vmatprep.subr.mxu0 0.0
        %323 = vmatpush1.msra.mxu0 0.0
        %324 = vmatprep.subr.mxu0 0.0
        %325 = vmatpush1.msra.mxu0 0.0
        %326 = vmatprep.subr.mxu0 0.0
        %327 = vmatpush1.msra.mxu0 0.0
        %328 = vmatprep.subr.mxu0 0.0
        %329 = vmatpush1.msra.mxu0 0.0
        %330 = vmatprep.subr.mxu0 0.0
        %331 = vmatpush1.msra.mxu0 0.0
        %332 = vmatprep.subr.mxu0 0.0
        %333 = vmatpush1.msra.mxu0 0.0
        %334 = vmatprep.subr.mxu0 0.0
        %335 = vmatpush1.msra.mxu0 0.0
        %336 = vmatprep.subr.mxu0 0.0
        %337 = vmatpush1.msra.mxu0 0.0
        %338 = vmatprep.subr.mxu0 0.0
        %339 = vmatpush1.msra.mxu0 0.0
        %340 = vmatprep.subr.mxu0 0.0
        %341 = vmatpush1.msra.mxu0 0.0
        %342 = vmatprep.subr.mxu0 0.0
        %343 = vmatpush1.msra.mxu0 0.0
        %344 = vmatprep.subr.mxu0 0.0
        %345 = vmatpush1.msra.mxu0 0.0
        %346 = vmatprep.subr.mxu0 0.0
        %347 = vmatpush1.msra.mxu0 0.0
        %348 = vmatprep.subr.mxu0 0.0
        %349 = vmatpush1.msra.mxu0 0.0
        %350 = vmatprep.mubr.f32.mxu0 0.0
        %351 = vmatmul.mubr.f32.gmra.mrb[0].mxu0 %v280
        %v352 = vpop.f32.mrb[0].mxu0
        %v353 = vadd.f32 0.0, %v352
        %v354 = vpop.f32.mrb[0].mxu0
        %355 = vdwg.mxu0
        %356 = vst.msk [vmem:[%s188] sm:$0xff] %vm202, %v353
        %s357 = sand.u32 %s112, 1
        %s358 = scalar_lea.sflag [#allocation3], %s357
        %s359 = sand.u32 %s112, 1
        %s360 = smul.addr %s359, 8
        %s361 = scalar_lea.vmem [#allocation2], %s360
        // Predicated region
        $region33: #{tpu_custom_call.1} parent=31 // pred_check
          %p362 = pneg %p122
        $region34: #{tpu_custom_call.1} parent=31 // pred_check_branch
          %364 = sbr.rel (%p362) target = $region36
        $region35: #{tpu_custom_call.1} parent=31 // pred_region
          %s366 = ssub.s32 128, 128
          %367 = vsyncadd %s358, %s366
          %s368 = sadd.s32 %s22, %s21
          %s369 = smul.addr %s368, 128
          %s370 = scalar_lea.hbm %s3, %s369
          %s372 = sshll.u32 %s361, 4
          %s373 = int_to_ptr.vmem [resolvable:$true] %s372
          %375 = dma.vmem_to_hbm [thread:$0]  %s373, 128, %s370, %s358
        $region36: #{tpu_custom_call.1} parent=31 // pred_fallthru
          _
      $region32: #{tpu_custom_call.1} parent=5 // pred_fallthru
        _
      %p376 = scmp.le.s32.totalorder 2, %s12
      // Predicated region
      $region37: #{tpu_custom_call.1} parent=5 // pred_check
        %p377 = pneg %p376
      $region38: #{tpu_custom_call.1} parent=5 // pred_check_branch
        %379 = sbr.rel (%p377) target = $region40
      $region39: #{tpu_custom_call.1} parent=5 // pred_region
        %s380 = ssub.s32 %s12, 2
        // Predicated region
        $region41: #{tpu_custom_call.1} parent=39 // pred_check
          %p381 = pneg %p128
        $region42: #{tpu_custom_call.1} parent=39 // pred_check_branch
          %383 = sbr.rel (%p381) target = $region44
        $region43: #{tpu_custom_call.1} parent=39 // pred_region
          %s384 = sand.u32 %s113, 1
          %s385 = scalar_lea.sflag [#allocation3], %s384
          %s386 = sand.u32 %s113, 1
          %s387 = smul.addr %s386, 8
          %s388 = scalar_lea.vmem [#allocation2], %s387
          %389 = dma.done %s385, 128
        $region44: #{tpu_custom_call.1} parent=39 // pred_fallthru
          _
      $region40: #{tpu_custom_call.1} parent=5 // pred_fallthru
        _
    $region6: #{tpu_custom_call.1} parent=1 // loop_footer
      %s16 = sadd.s32 1, %s12
    $region7: #{tpu_custom_call.1} parent=1 // loop_footer_branch
      %11 = sbr.rel target = $region3
    $region8: #{tpu_custom_call.1} parent=1 // loop_exit
      _
    %390 = vsyncpa [#allocation3], 1
    %s391 = scalar_lea.sflag [#allocation3], 1
    %392 = vsyncpa %s391, 1

</llo_original>
